<compile_context>
chip_gen: v5e
topology: v5e:2x2
jax: 0.10.0
libtpu: 0.0.40
codegen_flags: <defaults>
</compile_context>

<pallas_src>
import functools

import jax
import jax.numpy as jnp
from jax.experimental import pallas as pl
from jax.experimental.pallas import tpu as pltpu


def _ss_enc_class_dims_kernel(x_ref, w1_ref, b1_ref, w2_ref, b2_ref, out_ref,
                              *, use_bf16):
    # x:   (TB, K)
    # w1:  (K, Np), b1: (1, Np)      (Np = num_emotions padded to 128)
    # w2:  (Np, Np), b2: (1, Np)
    # out: (TB, N)                   (N = real num_emotions, narrow HBM output)
    x = x_ref[...]
    h = jnp.tanh(
        jnp.dot(x, w1_ref[...], preferred_element_type=jnp.float32) + b1_ref[...]
    )
    w2 = w2_ref[...]
    if use_bf16:
        # bf16 MXU inputs, f32 accumulation.
        h = h.astype(jnp.bfloat16)
        w2 = w2.astype(jnp.bfloat16)
    y = jnp.dot(h, w2, preferred_element_type=jnp.float32) + b2_ref[...]
    # Narrow (masked) store: only the real emotion columns go to HBM.
    out_ref[...] = y[:, : out_ref.shape[1]].astype(out_ref.dtype)


def _round_up(x, m):
    return (x + m - 1) // m * m


def _cdiv(a, b):
    return -(-a // b)


def ss_enc_class_dims_prepare_params(w1, b1, w2, b2):
    """Pad weights/biases once (model-init time), feature axis -> 128 lanes.

    Zero padding is exact: padded h columns are tanh(0)=0 and padded w2 rows
    are 0, so they contribute nothing to the real output columns.
    """
    K, N = w1.shape
    LANES = 128
    Np = _round_up(max(N, LANES), LANES)
    w1_p = jnp.zeros((K, Np), jnp.float32).at[:, :N].set(w1)
    b1_p = jnp.zeros((1, Np), jnp.float32).at[:, :N].set(b1.reshape(1, N))
    w2_p = jnp.zeros((Np, Np), jnp.float32).at[:N, :N].set(w2)
    b2_p = jnp.zeros((1, Np), jnp.float32).at[:, :N].set(b2.reshape(1, N))
    return (w1_p, b1_p, w2_p, b2_p, N)


def ss_enc_class_dims_forward(x, params, *, tile_b=8192, small_b_threshold=512,
                              use_bf16=True):
    """Forward pass of SS_Enc_Class_Dims: linear1 -> tanh -> linear2.

    x:      (B, input_size) float32
    params: output of ss_enc_class_dims_prepare_params
    returns (B, num_emotions) float32
    """
    w1_p, b1_p, w2_p, b2_p, N = params
    B, K = x.shape
    Np = w1_p.shape[1]

    kernel = functools.partial(_ss_enc_class_dims_kernel, use_bf16=use_bf16)

    # ---- Batch tiling (sublane multiple of 8, balanced tiles). ----
    B8 = _round_up(B, 8)
    if B8 <= small_b_threshold:
        # Genuinely small batch: single shot, no grid / pipeline machinery.
        n_tiles = 1
        TB = B8
        B_pad = B8
    else:
        n_tiles = max(2, _cdiv(B8, tile_b))
        if n_tiles % 2:  # even tile count -> both v7x TensorCores get equal work
            n_tiles += 1
        TB = _round_up(_cdiv(B8, n_tiles), 8)
        B_pad = n_tiles * TB  # padding is < 8 rows per tile

    if B_pad != B:
        x_p = jnp.zeros((B_pad, K), x.dtype).at[:B, :].set(x)
    else:
        x_p = x

    out_shape = jax.ShapeDtypeStruct((B_pad, N), x.dtype)

    if n_tiles == 1:
        y = pl.pallas_call(
            kernel,
            out_shape=out_shape,
        )(x_p, w1_p, b1_p, w2_p, b2_p)
    else:
        # Footprint per tile (f32, lane-padded in VMEM): x + out double-buffered
        # plus h/y temporaries ~= 7-9 * TB * 512 B.  Size the scoped VMEM limit
        # accordingly (>= 32 MiB, <= 64 MiB for v7x physical).
        vmem_limit = int(min(64 * 1024 * 1024, max(32 * 1024 * 1024, 9 * TB * 512)))
        y = pl.pallas_call(
            kernel,
            out_shape=out_shape,
            grid=(n_tiles,),
            in_specs=[
                pl.BlockSpec((TB, K), lambda i: (i, 0)),    # x streams
                pl.BlockSpec((K, Np), lambda i: (0, 0)),    # weights resident
                pl.BlockSpec((1, Np), lambda i: (0, 0)),
                pl.BlockSpec((Np, Np), lambda i: (0, 0)),
                pl.BlockSpec((1, Np), lambda i: (0, 0)),
            ],
            out_specs=pl.BlockSpec((TB, N), lambda i: (i, 0)),  # narrow output
            compiler_params=pltpu.CompilerParams(
                dimension_semantics=("parallel",),
                vmem_limit_bytes=vmem_limit,
            ),
        )(x_p, w1_p, b1_p, w2_p, b2_p)

    # Only batch padding (if any) needs trimming; feature axis is already exact.
    if B_pad != B:
        y = y[:B]
    return y


if __name__ == "__main__":
    # Module hyperparameters (from __init__ defaults).
    input_size = 4
    num_emotions = 7
    batch = 2

    key = jax.random.PRNGKey(0)
    kx, kw1, kb1, kw2, kb2 = jax.random.split(key, 5)

    x = jax.random.normal(kx, (batch, input_size), dtype=jnp.float32)
    # Stored as [in, out] (transposed vs torch's [out, in]).
    w1 = jax.random.normal(kw1, (input_size, num_emotions), dtype=jnp.float32) * 0.5
    b1 = jax.random.normal(kb1, (num_emotions,), dtype=jnp.float32) * 0.1
    w2 = jax.random.normal(kw2, (num_emotions, num_emotions), dtype=jnp.float32) * 0.5
    b2 = jax.random.normal(kb2, (num_emotions,), dtype=jnp.float32) * 0.1

    params = ss_enc_class_dims_prepare_params(w1, b1, w2, b2)
    ref_fn = lambda xx: jnp.tanh(xx @ w1 + b1) @ w2 + b2

    # --- Tiny case (no-grid path), exact f32 matmuls. ---
    out = ss_enc_class_dims_forward(x, params, use_bf16=False)
    out = jax.block_until_ready(out)
    assert out.shape == (batch, num_emotions)
    assert jnp.allclose(out, ref_fn(x), atol=1e-5, rtol=1e-5)

    # --- Tiny case, bf16 second matmul (default fast path). ---
    out16 = jax.block_until_ready(ss_enc_class_dims_forward(x, params))
    assert jnp.allclose(out16, ref_fn(x), atol=2e-2, rtol=2e-2)

    # --- Batch-tiled path (small tile_b/threshold just to exercise the grid). ---
    xb = jax.random.normal(jax.random.PRNGKey(1), (37, input_size), dtype=jnp.float32)
    out_b = ss_enc_class_dims_forward(
        xb, params, tile_b=16, small_b_threshold=8, use_bf16=False)
    out_b = jax.block_until_ready(out_b)
    assert out_b.shape == (37, num_emotions)
    assert jnp.allclose(out_b, ref_fn(xb), atol=1e-5, rtol=1e-5)

    out_b16 = jax.block_until_ready(
        ss_enc_class_dims_forward(xb, params, tile_b=16, small_b_threshold=8))
    assert jnp.allclose(out_b16, ref_fn(xb), atol=2e-2, rtol=2e-2)

    print("KERNEL_OK")
</pallas_src>

<mosaic_0001>
module attributes {stable_mosaic.version = 11 : i64} {
  func.func @_ss_enc_class_dims_kernel(%arg0: memref<8x4xf32, #tpu.memory_space<vmem>>, %arg1: memref<4x128xf32, #tpu.memory_space<vmem>>, %arg2: memref<1x128xf32, #tpu.memory_space<vmem>>, %arg3: memref<128x128xf32, #tpu.memory_space<vmem>>, %arg4: memref<1x128xf32, #tpu.memory_space<vmem>>, %arg5: memref<8x7xf32, #tpu.memory_space<vmem>>) attributes {dimension_semantics = [], scalar_prefetch = 0 : i64, scratch_operands = 0 : i64, tpu.core_type = #tpu.core_type<tc>} {
    %c0 = arith.constant 0 : index
    %c0_0 = arith.constant 0 : index
    %0 = vector.load %arg0[%c0, %c0_0] : memref<8x4xf32, #tpu.memory_space<vmem>>, vector<8x4xf32>
    %c0_1 = arith.constant 0 : index
    %c0_2 = arith.constant 0 : index
    %1 = vector.load %arg1[%c0_1, %c0_2] : memref<4x128xf32, #tpu.memory_space<vmem>>, vector<4x128xf32>
    %cst = arith.constant dense<0.000000e+00> : vector<8x128xf32>
    %2 = tpu.matmul %0, %1, %cst {dimension_numbers = #tpu.dot_dimension_numbers<[1], [0], [0], [1], [0, 0, 1, 1], [], []>} : vector<8x4xf32>, vector<4x128xf32>, vector<8x128xf32> -> vector<8x128xf32>
    %c0_3 = arith.constant 0 : index
    %c0_4 = arith.constant 0 : index
    %3 = vector.load %arg2[%c0_3, %c0_4] : memref<1x128xf32, #tpu.memory_space<vmem>>, vector<1x128xf32>
    %4 = vector.broadcast %3 : vector<1x128xf32> to vector<8x128xf32>
    %5 = arith.addf %2, %4 : vector<8x128xf32>
    %6 = math.tanh %5 : vector<8x128xf32>
    %c0_5 = arith.constant 0 : index
    %c0_6 = arith.constant 0 : index
    %7 = vector.load %arg3[%c0_5, %c0_6] : memref<128x128xf32, #tpu.memory_space<vmem>>, vector<128x128xf32>
    %cst_7 = arith.constant dense<0.000000e+00> : vector<8x128xf32>
    %8 = tpu.matmul %6, %7, %cst_7 {dimension_numbers = #tpu.dot_dimension_numbers<[1], [0], [0], [1], [0, 0, 1, 1], [], []>} : vector<8x128xf32>, vector<128x128xf32>, vector<8x128xf32> -> vector<8x128xf32>
    %c0_8 = arith.constant 0 : index
    %c0_9 = arith.constant 0 : index
    %9 = vector.load %arg4[%c0_8, %c0_9] : memref<1x128xf32, #tpu.memory_space<vmem>>, vector<1x128xf32>
    %10 = vector.broadcast %9 : vector<1x128xf32> to vector<8x128xf32>
    %11 = arith.addf %8, %10 : vector<8x128xf32>
    %12 = vector.extract_strided_slice %11 {offsets = [0, 0], sizes = [8, 7], strides = [1, 1]} : vector<8x128xf32> to vector<8x7xf32>
    %c0_10 = arith.constant 0 : index
    %c0_11 = arith.constant 0 : index
    %13 = vector.load %arg5[%c0_10, %c0_11] : memref<8x7xf32, #tpu.memory_space<vmem>>, vector<8x7xf32>
    tpu.vector_store %arg5[%c0_10, %c0_11], %12 {strides = array<i32>} : memref<8x7xf32, #tpu.memory_space<vmem>>, vector<8x7xf32>,
    return
  }
}

</mosaic_0001>

<llo_original>
// kernel: tpu_custom_call.1
$region0: #{tpu_custom_call.1}
  #allocation0 [shape = 'u32[]', space=smem, size = 0x4, offset = 0x4, fixed_abs, tag = 'smem constant byte address 0x4 - core index']
  #allocation1 [shape = 'u32[72,128]{1,0:T(1,128)}', space=vmem, size = 0x9000, scoped, tag = 'internal scratch']
  %s0 = inlined_call_operand.vmem [shape: f32[8,4], index: 0, kind: input, shape index: {}]
  %s1 = inlined_call_operand.vmem [shape: f32[4,128], index: 1, kind: input, shape index: {}]
  %s2 = inlined_call_operand.vmem [shape: f32[1,128], index: 2, kind: input, shape index: {}]
  %s3 = inlined_call_operand.hbm [shape: f32[128,128], index: 3, kind: input, shape index: {}]
  %s4 = inlined_call_operand.vmem [shape: f32[1,128], index: 4, kind: input, shape index: {}]
  %s5 = inlined_call_operand.hbm [shape: f32[8,7], index: 5, kind: output, shape index: {}]
  %s6 = sld [smem:[#allocation0]]
  $region34: #{tpu_custom_call.1} parent=0
    _
  %s8 = ssub.s32 1, %s6
  %s9 = scalar_select 0, %s8, %s6
  $region1: #{tpu_custom_call.1} parent=0
    #allocation2 [shape = 'u8[65536]{0}', space=vmem, size = 0x10000, scoped, tag = 'input window, operand 3, single buffered']
    #allocation3 [shape = 's32[1]{0}', space=sflag, size = 0x4, scoped, tag = 'scoped memory for tpu_custom_call.1']
    #allocation4 [shape = 's32[1]{0}', space=sflag, size = 0x4, scoped, tag = 'scoped memory for tpu_custom_call.1']
    #allocation5 [shape = 'u8[4096]{0}', space=vmem, size = 0x1000, scoped, tag = 'output window, operand 0, single buffered']
    %10 = vsyncpa [#allocation3], 0
    %11 = vsyncpa [#allocation4], 0
    // Predicated region
    $region2: #{tpu_custom_call.1} parent=1 // pred_check
      _
    $region3: #{tpu_custom_call.1} parent=1 // pred_check_branch
      %13 = sbr.rel (0) target = $region5
    $region4: #{tpu_custom_call.1} parent=1 // pred_region
      _
    $region5: #{tpu_custom_call.1} parent=1 // pred_fallthru
      _
    // Predicated region
    $region6: #{tpu_custom_call.1} parent=1 // pred_check
      _
    $region7: #{tpu_custom_call.1} parent=1 // pred_check_branch
      %15 = sbr.rel (0) target = $region9
    $region8: #{tpu_custom_call.1} parent=1 // pred_region
      _
    $region9: #{tpu_custom_call.1} parent=1 // pred_fallthru
      _
    // Predicated region
    $region10: #{tpu_custom_call.1} parent=1 // pred_check
      _
    $region11: #{tpu_custom_call.1} parent=1 // pred_check_branch
      %17 = sbr.rel (0) target = $region13
    $region12: #{tpu_custom_call.1} parent=1 // pred_region
      _
    $region13: #{tpu_custom_call.1} parent=1 // pred_fallthru
      _
    // Predicated region
    $region14: #{tpu_custom_call.1} parent=1 // pred_check
      _
    $region15: #{tpu_custom_call.1} parent=1 // pred_check_branch
      %19 = sbr.rel (0) target = $region17
    $region16: #{tpu_custom_call.1} parent=1 // pred_region
      %21 = vsyncadd [#allocation3], 0
      %s22 = sshll.u32 %s3, 4
      %s23 = int_to_ptr.hbm [resolvable:$true] %s22
      %s24 = sshll.u32 [#allocation2], 4
      %s25 = int_to_ptr.vmem [resolvable:$true] %s24
      %30 = dma.hbm_to_vmem [thread:$0]  %s23, 2048, %s25, [#allocation3], 128, 128, 8
    $region17: #{tpu_custom_call.1} parent=1 // pred_fallthru
      _
    // Predicated region
    $region18: #{tpu_custom_call.1} parent=1 // pred_check
      _
    $region19: #{tpu_custom_call.1} parent=1 // pred_check_branch
      %32 = sbr.rel (0) target = $region21
    $region20: #{tpu_custom_call.1} parent=1 // pred_region
      _
    $region21: #{tpu_custom_call.1} parent=1 // pred_fallthru
      _
    // Predicated region
    $region22: #{tpu_custom_call.1} parent=1 // pred_check
      _
    $region23: #{tpu_custom_call.1} parent=1 // pred_check_branch
      %34 = sbr.rel (0) target = $region25
    $region24: #{tpu_custom_call.1} parent=1 // pred_region
      %36 = dma.done [#allocation3], 2048
    $region25: #{tpu_custom_call.1} parent=1 // pred_fallthru
      _
    %v37 = vld [vmem:[%s0] sm:$0xff]
    %v38 = vld [vmem:[%s1] sm:$0xf]
    %v39 = vld [vmem:[%s2] sm:$0x1]
    %v41 = vperm.slane %v39, 0
    %vm43 = vcmask 31744
    %v45 = vsel %vm43, %v37, 0
    %vm47 = vcmask 1043456
    %v49 = vsel %vm47, %v38, 0
    %51 = vmatpush.msra.mxu0 0.0
    %52 = vmatpush.msra.mxu0 0.0
    %53 = vmatpush.msra.mxu0 0.0
    %54 = vmatpush.msra.mxu0 0.0
    %55 = vmatpush.msra.mxu0 0.0
    %56 = vmatpush.msra.mxu0 0.0
    %57 = vmatpush.msra.mxu0 0.0
    %58 = vmatpush.msra.mxu0 0.0
    %59 = vmatpush.msra.mxu0 0.0
    %60 = vmatpush.msra.mxu0 0.0
    %61 = vmatpush.msra.mxu0 0.0
    %62 = vmatpush.msra.mxu0 0.0
    %63 = vmatpush.msra.mxu0 0.0
    %64 = vmatpush.msra.mxu0 0.0
    %65 = vmatpush.msra.mxu0 0.0
    %66 = vmatpush.msra.mxu0 %v49
    %67 = vmatmul.f32.gmra.mxu0 %v45
    %v68 = vpop.f32.mrf.mxu0
    %v69 = vadd.f32 %v41, %v68
    %70 = vdwg.mxu0
    %v71 = vtanh.pop %v69
    %v72 = vld [vmem:[#allocation2] sm:$0xff]
    %v73 = vld [vmem:[#allocation2 + $0x8] sm:$0xff]
    %v74 = vld [vmem:[#allocation2 + $0x10] sm:$0xff]
    %v75 = vld [vmem:[#allocation2 + $0x18] sm:$0xff]
    %v76 = vld [vmem:[#allocation2 + $0x20] sm:$0xff]
    %v77 = vld [vmem:[#allocation2 + $0x28] sm:$0xff]
    %v78 = vld [vmem:[#allocation2 + $0x30] sm:$0xff]
    %v79 = vld [vmem:[#allocation2 + $0x38] sm:$0xff]
    %v80 = vld [vmem:[#allocation2 + $0x40] sm:$0xff]
    %v81 = vld [vmem:[#allocation2 + $0x48] sm:$0xff]
    %v82 = vld [vmem:[#allocation2 + $0x50] sm:$0xff]
    %v83 = vld [vmem:[#allocation2 + $0x58] sm:$0xff]
    %v84 = vld [vmem:[#allocation2 + $0x60] sm:$0xff]
    %v85 = vld [vmem:[#allocation2 + $0x68] sm:$0xff]
    %v86 = vld [vmem:[#allocation2 + $0x70] sm:$0xff]
    %v87 = vld [vmem:[#allocation2 + $0x78] sm:$0xff]
    %v88 = vld [vmem:[%s4] sm:$0x1]
    %v90 = vperm.slane %v88, 0
    %92 = vmatpush.msra.mxu0 %v87
    %93 = vmatpush.msra.mxu0 %v86
    %94 = vmatpush.msra.mxu0 %v85
    %95 = vmatpush.msra.mxu0 %v84
    %96 = vmatpush.msra.mxu0 %v83
    %97 = vmatpush.msra.mxu0 %v82
    %98 = vmatpush.msra.mxu0 %v81
    %99 = vmatpush.msra.mxu0 %v80
    %100 = vmatpush.msra.mxu0 %v79
    %101 = vmatpush.msra.mxu0 %v78
    %102 = vmatpush.msra.mxu0 %v77
    %103 = vmatpush.msra.mxu0 %v76
    %104 = vmatpush.msra.mxu0 %v75
    %105 = vmatpush.msra.mxu0 %v74
    %106 = vmatpush.msra.mxu0 %v73
    %107 = vmatpush.msra.mxu0 %v72
    %108 = vmatmul.f32.gmra.mxu0 %v71
    %v109 = vpop.f32.mrf.mxu0
    %v110 = vadd.f32 %v90, %v109
    %111 = vdwg.mxu0
    %vm112 = vcmask 56320
    %113 = vst.msk [vmem:[#allocation5] sm:$0xff] %vm112, %v110
    // Predicated region
    $region26: #{tpu_custom_call.1} parent=1 // pred_check
      _
    $region27: #{tpu_custom_call.1} parent=1 // pred_check_branch
      %115 = sbr.rel (0) target = $region29
    $region28: #{tpu_custom_call.1} parent=1 // pred_region
      %117 = vsyncadd [#allocation4], 0
      %s119 = sshll.u32 [#allocation5], 4
      %s120 = int_to_ptr.vmem [resolvable:$true] %s119
      %s121 = sshll.u32 %s5, 4
      %s122 = int_to_ptr.hbm [resolvable:$true] %s121
      %124 = dma.vmem_to_hbm [thread:$0]  %s120, 128, %s122, [#allocation4]
    $region29: #{tpu_custom_call.1} parent=1 // pred_fallthru
      _
    // Predicated region
    $region30: #{tpu_custom_call.1} parent=1 // pred_check
      _
    $region31: #{tpu_custom_call.1} parent=1 // pred_check_branch
      %126 = sbr.rel (0) target = $region33
    $region32: #{tpu_custom_call.1} parent=1 // pred_region
      %128 = dma.done [#allocation4], 128
    $region33: #{tpu_custom_call.1} parent=1 // pred_fallthru
      _
    %129 = vsyncpa [#allocation3], 1
    %130 = vsyncpa [#allocation4], 1

</llo_original>
